<compile_context>
chip_gen: v7x
topology: tpu7x:2x2x1
jax: 0.10.0
libtpu: 0.0.40
codegen_flags: <defaults>
</compile_context>

<pallas_src>
import functools

import jax
import jax.numpy as jnp
from jax.experimental import pallas as pl
from jax.experimental.pallas import tpu as pltpu


# ---------------------------------------------------------------------------
# Kernels
# ---------------------------------------------------------------------------

def _agcn_kernel_shared(a_ref, x_ref, w_ref, b_ref, o_ref, *,
                        cheb_k, dim_in, batch_tile):
    """Shared (2D) adjacency.  `batch_tile` batch elements are folded into the
    lane dimension.

    a_ref: (N, N)            shared adjacency
    x_ref: (1, N, tb*C)      folded features, x[n, t*C + c]
    w_ref: (K*C, O)          original (un-split) weight
    b_ref: (1, tb*O)         bias tiled per folded batch element
    o_ref: (1, N, tb*O)      folded (lane-dense) output slab
    """
    a = a_ref[...]
    xt = x_ref[0]                           # (N, tb*C), original dtype
    w = w_ref[...]                          # (K*C, O)
    mxu_dtype = xt.dtype

    # Chebyshev recursion in (folded) feature space; MXU operands in input
    # dtype, recursion carries in f32.
    z_mxu = [xt]                                                    # T_0 x
    z1 = jnp.dot(a, xt, preferred_element_type=jnp.float32)        # T_1 x (f32)
    z_mxu.append(z1.astype(mxu_dtype))
    z_prev_f32 = xt.astype(jnp.float32)
    z_cur_f32 = z1
    for _k in range(2, cheb_k):
        z_next = 2.0 * jnp.dot(a, z_mxu[-1],
                               preferred_element_type=jnp.float32) - z_prev_f32
        z_mxu.append(z_next.astype(mxu_dtype))
        z_prev_f32, z_cur_f32 = z_cur_f32, z_next

    # Fused projection: one (N, K*C) @ (K*C, O) matmul per folded batch element.
    outs = []
    for t in range(batch_tile):
        stack_t = jnp.concatenate(
            [z[:, t * dim_in:(t + 1) * dim_in] for z in z_mxu], axis=-1)
        outs.append(jnp.dot(stack_t, w, preferred_element_type=jnp.float32))

    out = jnp.concatenate(outs, axis=-1) + b_ref[...].astype(jnp.float32)
    o_ref[0] = out.astype(o_ref.dtype)       # single lane-dense store


def _agcn_kernel_batched(a_ref, x_ref, w_ref, b_ref, o_ref, *, cheb_k):
    """Per-batch (3D) adjacency: each batch element has its own A.

    a_ref: (tb, N, N), x_ref: (tb, N, C), w_ref: (K*C, O), b_ref: (1, tb*O),
    o_ref: (1, N, tb*O)   (lane-dense folded output)
    """
    w = w_ref[...]
    batch_tile = a_ref.shape[0]

    outs = []
    for t in range(batch_tile):
        a = a_ref[t]
        x = x_ref[t]
        mxu_dtype = x.dtype

        z_mxu = [x]                                                 # T_0 x
        z1 = jnp.dot(a, x, preferred_element_type=jnp.float32)     # T_1 x
        z_mxu.append(z1.astype(mxu_dtype))
        z_prev_f32 = x.astype(jnp.float32)
        z_cur_f32 = z1
        for _k in range(2, cheb_k):
            z_next = 2.0 * jnp.dot(a, z_mxu[-1],
                                   preferred_element_type=jnp.float32) - z_prev_f32
            z_mxu.append(z_next.astype(mxu_dtype))
            z_prev_f32, z_cur_f32 = z_cur_f32, z_next

        stack = jnp.concatenate(z_mxu, axis=-1)                     # (N, K*C)
        outs.append(jnp.dot(stack, w, preferred_element_type=jnp.float32))

    out = jnp.concatenate(outs, axis=-1) + b_ref[...].astype(jnp.float32)
    o_ref[0] = out.astype(o_ref.dtype)


# ---------------------------------------------------------------------------
# Wrapper
# ---------------------------------------------------------------------------

_VMEM_BUDGET = 24 * 1024 * 1024     # working-set target for tile sizing
_VMEM_LIMIT = 48 * 1024 * 1024      # explicit scoped-VMEM limit (fits all gens)


def _round_up(n, m):
    return ((n + m - 1) // m) * m


def agcn_forward(x, support, weights, bias, cheb_k):
    """x: [B, N, C]; support: [N, N] (shared) or [B, N, N] (per-batch);
    weights: [cheb_k*C, O]; bias: [O].  Returns [B, N, O]."""
    if isinstance(support, (list, tuple)):
        assert len(support) == 1, "AGCN weights only admit a single support"
        support = support[0]
    assert cheb_k >= 2, "cheb_k must be >= 2 (weights have cheb_k*dim_in rows)"

    B, N, C = x.shape
    KC, O = weights.shape
    assert KC == cheb_k * C

    dtype = x.dtype
    itemsize = jnp.dtype(dtype).itemsize

    # Pad N to a sublane/lane friendly size (exact: padded A rows/cols are 0).
    n_mult = 128 if N >= 128 else 8
    Np = _round_up(N, n_mult)
    if Np != N:
        x = jnp.pad(x, ((0, 0), (0, Np - N), (0, 0)))
        if support.ndim == 2:
            support = jnp.pad(support, ((0, Np - N), (0, Np - N)))
        else:
            support = jnp.pad(support, ((0, 0), (0, Np - N), (0, Np - N)))

    if support.ndim == 2:
        # ---------------- Shared adjacency: fold batch into lanes -----------
        tb_lane = max(1, 1024 // max(C, 1))
        fixed = 2 * Np * Np * itemsize
        per_tb = Np * (2 * C * itemsize + 2 * O * itemsize
                       + (cheb_k + 2) * C * 4 + O * 4)
        cap = max(1, (_VMEM_BUDGET - fixed) // max(per_tb, 1))
        tb = max(1, min(B, tb_lane, cap))
        bc = pl.cdiv(B, tb)
        # Prefer >= 2 grid steps (v7x megacore) if lanes stay reasonably wide.
        if bc == 1 and B > 1:
            tb_half = -(-B // 2)
            if tb_half * C >= 256:
                tb = tb_half
                bc = pl.cdiv(B, tb)
        Bp = bc * tb
        if Bp != B:
            x = jnp.pad(x, ((0, Bp - B), (0, 0), (0, 0)))

        xt = x.reshape(bc, tb, Np, C).transpose(0, 2, 1, 3).reshape(bc, Np, tb * C)
        bias_f = jnp.tile(bias, (tb,)).reshape(1, tb * O)

        kernel = functools.partial(_agcn_kernel_shared, cheb_k=cheb_k,
                                   dim_in=C, batch_tile=tb)
        out = pl.pallas_call(
            kernel,
            out_shape=jax.ShapeDtypeStruct((bc, Np, tb * O), dtype),
            grid_spec=pltpu.PrefetchScalarGridSpec(
                num_scalar_prefetch=0,
                grid=(bc,),
                in_specs=[
                    pl.BlockSpec((Np, Np), lambda g: (0, 0)),
                    pl.BlockSpec((1, Np, tb * C), lambda g: (g, 0, 0)),
                    pl.BlockSpec((cheb_k * C, O), lambda g: (0, 0)),
                    pl.BlockSpec((1, tb * O), lambda g: (0, 0)),
                ],
                out_specs=pl.BlockSpec((1, Np, tb * O), lambda g: (g, 0, 0)),
            ),
            compiler_params=pltpu.CompilerParams(
                dimension_semantics=("parallel",),
                vmem_limit_bytes=_VMEM_LIMIT),
        )(support, xt, weights, bias_f)

        out = out.reshape(bc, Np, tb, O).transpose(0, 2, 1, 3).reshape(Bp, Np, O)
        return out[:B, :N]

    # ---------------- Per-batch adjacency: grid over batch chunks -----------
    fixed = 2 * cheb_k * C * O * itemsize
    per_tb = (2 * Np * Np * itemsize + 2 * Np * C * itemsize
              + (cheb_k + 2) * Np * C * 4 + 2 * Np * O * itemsize + Np * O * 4)
    cap = max(1, (_VMEM_BUDGET - fixed) // max(per_tb, 1))
    tb = max(1, min(B, cap, 32))
    bc = pl.cdiv(B, tb)
    if bc == 1 and B > 1:          # guarantee >= 2 grid steps for megacore
        tb = -(-B // 2)
        bc = pl.cdiv(B, tb)
    Bp = bc * tb
    if Bp != B:
        x = jnp.pad(x, ((0, Bp - B), (0, 0), (0, 0)))
        support = jnp.pad(support, ((0, Bp - B), (0, 0), (0, 0)))
    bias_f = jnp.tile(bias, (tb,)).reshape(1, tb * O)

    kernel = functools.partial(_agcn_kernel_batched, cheb_k=cheb_k)
    out = pl.pallas_call(
        kernel,
        out_shape=jax.ShapeDtypeStruct((bc, Np, tb * O), dtype),
        grid_spec=pltpu.PrefetchScalarGridSpec(
            num_scalar_prefetch=0,
            grid=(bc,),
            in_specs=[
                pl.BlockSpec((tb, Np, Np), lambda g: (g, 0, 0)),
                pl.BlockSpec((tb, Np, C), lambda g: (g, 0, 0)),
                pl.BlockSpec((cheb_k * C, O), lambda g: (0, 0)),
                pl.BlockSpec((1, tb * O), lambda g: (0, 0)),
            ],
            out_specs=pl.BlockSpec((1, Np, tb * O), lambda g: (g, 0, 0)),
        ),
        compiler_params=pltpu.CompilerParams(
            dimension_semantics=("parallel",),
            vmem_limit_bytes=_VMEM_LIMIT),
    )(support, x, weights, bias_f)

    out = out.reshape(bc, Np, tb, O).transpose(0, 2, 1, 3).reshape(Bp, Np, O)
    return out[:B, :N]


# ---------------------------------------------------------------------------
# Pure-JAX reference (transcription of the PyTorch forward, single support)
# ---------------------------------------------------------------------------

def _reference(x, support, weights, bias, cheb_k):
    B, N, C = x.shape
    if support.ndim == 2:
        sks = [jnp.eye(N, dtype=x.dtype), support]
        for _ in range(2, cheb_k):
            sks.append(2.0 * support @ sks[-1] - sks[-2])
        xg = jnp.concatenate([jnp.einsum('nm,bmc->bnc', g, x) for g in sks], axis=-1)
    else:
        eye = jnp.broadcast_to(jnp.eye(N, dtype=x.dtype), (B, N, N))
        sks = [eye, support]
        for _ in range(2, cheb_k):
            sks.append(2.0 * jnp.matmul(support, sks[-1]) - sks[-2])
        xg = jnp.concatenate([jnp.einsum('bnm,bmc->bnc', g, x) for g in sks], axis=-1)
    return jnp.einsum('bni,io->bno', xg, weights) + bias


if __name__ == "__main__":
    B, N, dim_in, dim_out, cheb_k = 2, 16, 4, 32, 3

    key = jax.random.PRNGKey(0)
    k1, k2, k3, k4 = jax.random.split(key, 4)

    x = jax.random.normal(k1, (B, N, dim_in), jnp.float32)

    # Shared (2D) adaptive adjacency, row-stochastic like DGCRN's learned support.
    support2d = jax.nn.softmax(
        jax.nn.relu(jax.random.normal(k2, (N, N), jnp.float32)), axis=-1)
    # Per-batch (3D) adjacency to exercise the other branch of the forward.
    support3d = jax.nn.softmax(
        jax.nn.relu(jax.random.normal(k4, (B, N, N), jnp.float32)), axis=-1)

    # Parameters: xavier_normal_ on (cheb_k*dim_in, dim_out), zero bias.
    fan_in, fan_out = cheb_k * dim_in, dim_out
    std = (2.0 / (fan_in + fan_out)) ** 0.5
    weights = std * jax.random.normal(k3, (fan_in, fan_out), jnp.float32)
    bias = jnp.zeros((dim_out,), jnp.float32)

    ok = True
    for support in (support2d, support3d):
        out = jax.block_until_ready(agcn_forward(x, support, weights, bias, cheb_k))
        ref = _reference(x, support, weights, bias, cheb_k)
        ok &= out.shape == (B, N, dim_out)
        ok &= bool(jnp.allclose(out, ref, atol=1e-4, rtol=1e-4))

    if ok:
        print("KERNEL_OK")
    else:
        print("KERNEL_MISMATCH")
</pallas_src>

<mosaic_0001>
module attributes {stable_mosaic.version = 11 : i64} {
  func.func @_agcn_kernel_shared(%arg0: i32, %arg1: memref<16x16xf32, #tpu.memory_space<vmem>>, %arg2: memref<1x16x8xf32, #tpu.memory_space<vmem>>, %arg3: memref<12x32xf32, #tpu.memory_space<vmem>>, %arg4: memref<1x64xf32, #tpu.memory_space<vmem>>, %arg5: memref<1x16x64xf32, #tpu.memory_space<vmem>>) attributes {dimension_semantics = [#tpu.dimension_semantics<parallel>], iteration_bounds = array<i64: 1>, scalar_prefetch = 0 : i64, scratch_operands = 0 : i64, tpu.core_type = #tpu.core_type<tc>, window_params = [{pipeline_mode = #tpu.pipeline_mode<synchronous>, transform_indices = @transform_0, window_bounds = array<i64: 16, 16>}, {transform_indices = @transform_1, window_bounds = array<i64: 1, 16, 8>}, {pipeline_mode = #tpu.pipeline_mode<synchronous>, transform_indices = @transform_2, window_bounds = array<i64: 12, 32>}, {pipeline_mode = #tpu.pipeline_mode<synchronous>, transform_indices = @transform_3, window_bounds = array<i64: 1, 64>}, {transform_indices = @transform_4, window_bounds = array<i64: 1, 16, 64>}]} {
    %c0 = arith.constant 0 : index
    %c0_0 = arith.constant 0 : index
    %0 = vector.load %arg1[%c0, %c0_0] : memref<16x16xf32, #tpu.memory_space<vmem>>, vector<16x16xf32>
    %c0_1 = arith.constant 0 : index
    %c0_2 = arith.constant 0 : index
    %c0_3 = arith.constant 0 : index
    %1 = vector.load %arg2[%c0_1, %c0_2, %c0_3] : memref<1x16x8xf32, #tpu.memory_space<vmem>>, vector<1x16x8xf32>
    %2 = vector.shape_cast %1 : vector<1x16x8xf32> to vector<16x8xf32>
    %c0_4 = arith.constant 0 : index
    %c0_5 = arith.constant 0 : index
    %3 = vector.load %arg3[%c0_4, %c0_5] : memref<12x32xf32, #tpu.memory_space<vmem>>, vector<12x32xf32>
    %cst = arith.constant dense<0.000000e+00> : vector<16x8xf32>
    %4 = tpu.matmul %0, %2, %cst {dimension_numbers = #tpu.dot_dimension_numbers<[1], [0], [0], [1], [0, 0, 1, 1], [], []>} : vector<16x16xf32>, vector<16x8xf32>, vector<16x8xf32> -> vector<16x8xf32>
    %cst_6 = arith.constant dense<0.000000e+00> : vector<16x8xf32>
    %5 = tpu.matmul %0, %4, %cst_6 {dimension_numbers = #tpu.dot_dimension_numbers<[1], [0], [0], [1], [0, 0, 1, 1], [], []>} : vector<16x16xf32>, vector<16x8xf32>, vector<16x8xf32> -> vector<16x8xf32>
    %cst_7 = arith.constant 2.000000e+00 : f32
    %6 = vector.broadcast %cst_7 : f32 to vector<16x8xf32>
    %7 = arith.mulf %6, %5 : vector<16x8xf32>
    %8 = arith.subf %7, %2 : vector<16x8xf32>
    %9 = vector.extract_strided_slice %2 {offsets = [0, 0], sizes = [16, 4], strides = [1, 1]} : vector<16x8xf32> to vector<16x4xf32>
    %10 = vector.extract_strided_slice %4 {offsets = [0, 0], sizes = [16, 4], strides = [1, 1]} : vector<16x8xf32> to vector<16x4xf32>
    %11 = vector.extract_strided_slice %8 {offsets = [0, 0], sizes = [16, 4], strides = [1, 1]} : vector<16x8xf32> to vector<16x4xf32>
    %12 = tpu.concatenate %9, %10, %11 in 1 : vector<16x4xf32>, vector<16x4xf32>, vector<16x4xf32> -> vector<16x12xf32>
    %cst_8 = arith.constant dense<0.000000e+00> : vector<16x32xf32>
    %13 = tpu.matmul %12, %3, %cst_8 {dimension_numbers = #tpu.dot_dimension_numbers<[1], [0], [0], [1], [0, 0, 1, 1], [], []>} : vector<16x12xf32>, vector<12x32xf32>, vector<16x32xf32> -> vector<16x32xf32>
    %14 = vector.extract_strided_slice %2 {offsets = [0, 4], sizes = [16, 4], strides = [1, 1]} : vector<16x8xf32> to vector<16x4xf32>
    %15 = vector.extract_strided_slice %4 {offsets = [0, 4], sizes = [16, 4], strides = [1, 1]} : vector<16x8xf32> to vector<16x4xf32>
    %16 = vector.extract_strided_slice %8 {offsets = [0, 4], sizes = [16, 4], strides = [1, 1]} : vector<16x8xf32> to vector<16x4xf32>
    %17 = tpu.concatenate %14, %15, %16 in 1 : vector<16x4xf32>, vector<16x4xf32>, vector<16x4xf32> -> vector<16x12xf32>
    %cst_9 = arith.constant dense<0.000000e+00> : vector<16x32xf32>
    %18 = tpu.matmul %17, %3, %cst_9 {dimension_numbers = #tpu.dot_dimension_numbers<[1], [0], [0], [1], [0, 0, 1, 1], [], []>} : vector<16x12xf32>, vector<12x32xf32>, vector<16x32xf32> -> vector<16x32xf32>
    %19 = tpu.concatenate %13, %18 in 1 : vector<16x32xf32>, vector<16x32xf32> -> vector<16x64xf32>
    %c0_10 = arith.constant 0 : index
    %c0_11 = arith.constant 0 : index
    %20 = vector.load %arg4[%c0_10, %c0_11] : memref<1x64xf32, #tpu.memory_space<vmem>>, vector<1x64xf32>
    %21 = vector.broadcast %20 : vector<1x64xf32> to vector<16x64xf32>
    %22 = arith.addf %19, %21 : vector<16x64xf32>
    %c0_12 = arith.constant 0 : index
    %c0_13 = arith.constant 0 : index
    %c0_14 = arith.constant 0 : index
    %23 = vector.load %arg5[%c0_12, %c0_13, %c0_14] : memref<1x16x64xf32, #tpu.memory_space<vmem>>, vector<1x16x64xf32>
    %24 = vector.shape_cast %23 : vector<1x16x64xf32> to vector<16x64xf32>
    %25 = vector.shape_cast %22 : vector<16x64xf32> to vector<1x16x64xf32>
    tpu.vector_store %arg5[%c0_12, %c0_13, %c0_14], %25 {strides = array<i32>} : memref<1x16x64xf32, #tpu.memory_space<vmem>>, vector<1x16x64xf32>,
    return
  }
  func.func @transform_0(%arg0: i32) -> (i32, i32) {
    %c0_i32 = arith.constant 0 : i32
    %c0_i32_0 = arith.constant 0 : i32
    %c0_i32_1 = arith.constant 0 : i32
    return %c0_i32, %c0_i32_0 : i32, i32
  }
  func.func @transform_1(%arg0: i32) -> (i32, i32, i32) {
    %c0_i32 = arith.constant 0 : i32
    %c0_i32_0 = arith.constant 0 : i32
    %c0_i32_1 = arith.constant 0 : i32
    return %arg0, %c0_i32, %c0_i32_0 : i32, i32, i32
  }
  func.func @transform_2(%arg0: i32) -> (i32, i32) {
    %c0_i32 = arith.constant 0 : i32
    %c0_i32_0 = arith.constant 0 : i32
    %c0_i32_1 = arith.constant 0 : i32
    return %c0_i32, %c0_i32_0 : i32, i32
  }
  func.func @transform_3(%arg0: i32) -> (i32, i32) {
    %c0_i32 = arith.constant 0 : i32
    %c0_i32_0 = arith.constant 0 : i32
    %c0_i32_1 = arith.constant 0 : i32
    return %c0_i32, %c0_i32_0 : i32, i32
  }
  func.func @transform_4(%arg0: i32) -> (i32, i32, i32) {
    %c0_i32 = arith.constant 0 : i32
    %c0_i32_0 = arith.constant 0 : i32
    %c0_i32_1 = arith.constant 0 : i32
    return %arg0, %c0_i32, %c0_i32_0 : i32, i32, i32
  }
}

</mosaic_0001>

<llo_original>
// kernel: tpu_custom_call.1
$region0: #{tpu_custom_call.1}
  #allocation0 [shape = 'u32[]', space=smem, size = 0x4, offset = 0x4, fixed_abs, tag = 'smem constant byte address 0x4 - core index']
  #allocation1 [shape = 'u32[144,128]{1,0:T(1,128)}', space=vmem, size = 0x12000, scoped, tag = 'internal scratch']
  %s0 = inlined_call_operand.vmem [shape: f32[16,16], index: 0, kind: input, shape index: {}]
  %s1 = inlined_call_operand.vmem [shape: f32[1,16,8], index: 1, kind: input, shape index: {}]
  %s2 = inlined_call_operand.hbm [shape: f32[12,32], index: 2, kind: input, shape index: {}]
  %s3 = inlined_call_operand.vmem [shape: f32[1,64], index: 3, kind: input, shape index: {}]
  %s4 = inlined_call_operand.hbm [shape: f32[1,16,64], index: 4, kind: output, shape index: {}]
  %s5 = sld [smem:[#allocation0]]
  $region30: #{tpu_custom_call.1} parent=0
    _
  %s7 = ssub.s32 1, %s5
  %s8 = scalar_select 0, %s7, %s5
  $region1: #{tpu_custom_call.1} parent=0
    #allocation2 [shape = 'u8[8192]{0}', space=vmem, size = 0x2000, scoped, tag = 'input window, operand 2, single buffered']
    #allocation3 [shape = 's32[1]{0}', space=sflag, size = 0x4, scoped, tag = 'scoped memory for tpu_custom_call.1']
    #allocation4 [shape = 's32[1]{0}', space=sflag, size = 0x4, scoped, tag = 'scoped memory for tpu_custom_call.1']
    #allocation5 [shape = 'u8[8192]{0}', space=vmem, size = 0x2000, scoped, tag = 'output window, operand 0, single buffered']
    %9 = vsyncpa [#allocation3], 0
    %10 = vsyncpa [#allocation4], 0
    // Predicated region
    $region2: #{tpu_custom_call.1} parent=1 // pred_check
      _
    $region3: #{tpu_custom_call.1} parent=1 // pred_check_branch
      %12 = sbr.rel (0) target = $region5
    $region4: #{tpu_custom_call.1} parent=1 // pred_region
      _
    $region5: #{tpu_custom_call.1} parent=1 // pred_fallthru
      _
    // Predicated region
    $region6: #{tpu_custom_call.1} parent=1 // pred_check
      _
    $region7: #{tpu_custom_call.1} parent=1 // pred_check_branch
      %14 = sbr.rel (0) target = $region9
    $region8: #{tpu_custom_call.1} parent=1 // pred_region
      _
    $region9: #{tpu_custom_call.1} parent=1 // pred_fallthru
      _
    // Predicated region
    $region10: #{tpu_custom_call.1} parent=1 // pred_check
      _
    $region11: #{tpu_custom_call.1} parent=1 // pred_check_branch
      %16 = sbr.rel (0) target = $region13
    $region12: #{tpu_custom_call.1} parent=1 // pred_region
      %s18 = ssub.s32 256, 256
      %19 = vsyncadd [#allocation3], %s18
      %s20 = sshll.u32 [#allocation2], 4
      %s21 = int_to_ptr.vmem [resolvable:$true] %s20
      %26 = dma.hbm_to_vmem [thread:$0]  %s2, 256, %s21, [#allocation3], 128, 128, 8
    $region13: #{tpu_custom_call.1} parent=1 // pred_fallthru
      _
    // Predicated region
    $region14: #{tpu_custom_call.1} parent=1 // pred_check
      _
    $region15: #{tpu_custom_call.1} parent=1 // pred_check_branch
      %28 = sbr.rel (0) target = $region17
    $region16: #{tpu_custom_call.1} parent=1 // pred_region
      _
    $region17: #{tpu_custom_call.1} parent=1 // pred_fallthru
      _
    // Predicated region
    $region18: #{tpu_custom_call.1} parent=1 // pred_check
      _
    $region19: #{tpu_custom_call.1} parent=1 // pred_check_branch
      %30 = sbr.rel (0) target = $region21
    $region20: #{tpu_custom_call.1} parent=1 // pred_region
      %31 = dma.done [#allocation3], 256
    $region21: #{tpu_custom_call.1} parent=1 // pred_fallthru
      _
    %v32 = vld [vmem:[%s0] sm:$0xff]
    %v33 = vld [vmem:[%s0 + $0x8] sm:$0xff]
    %v34 = vld [vmem:[%s1] sm:$0xff]
    %v35 = vld [vmem:[%s1 + $0x8] sm:$0xff]
    %v36 = vld [vmem:[#allocation2] sm:$0xff]
    %v37 = vld [vmem:[#allocation2 + $0x8] sm:$0xf]
    %vm38 = vcmask 130048
    %v40 = vsel %vm38, %v32, 0
    %v43 = vsel %vm38, %v33, 0
    %45 = vmatprep.subr.mxu0 0.0
    %46 = vmatpush1.msra.mxu0 %v34
    %47 = vmatprep.subr.mxu0 0.0
    %48 = vmatpush1.msra.mxu0 %v35
    %49 = vmatprep.subr.mxu0 0.0
    %50 = vmatpush1.msra.mxu0 0.0
    %51 = vmatprep.subr.mxu0 0.0
    %52 = vmatpush1.msra.mxu0 0.0
    %53 = vmatprep.subr.mxu0 0.0
    %54 = vmatpush1.msra.mxu0 0.0
    %55 = vmatprep.subr.mxu0 0.0
    %56 = vmatpush1.msra.mxu0 0.0
    %57 = vmatprep.subr.mxu0 0.0
    %58 = vmatpush1.msra.mxu0 0.0
    %59 = vmatprep.subr.mxu0 0.0
    %60 = vmatpush1.msra.mxu0 0.0
    %61 = vmatprep.subr.mxu0 0.0
    %62 = vmatpush1.msra.mxu0 0.0
    %63 = vmatprep.subr.mxu0 0.0
    %64 = vmatpush1.msra.mxu0 0.0
    %65 = vmatprep.subr.mxu0 0.0
    %66 = vmatpush1.msra.mxu0 0.0
    %67 = vmatprep.subr.mxu0 0.0
    %68 = vmatpush1.msra.mxu0 0.0
    %69 = vmatprep.subr.mxu0 0.0
    %70 = vmatpush1.msra.mxu0 0.0
    %71 = vmatprep.subr.mxu0 0.0
    %72 = vmatpush1.msra.mxu0 0.0
    %73 = vmatprep.subr.mxu0 0.0
    %74 = vmatpush1.msra.mxu0 0.0
    %75 = vmatprep.subr.mxu0 0.0
    %76 = vmatpush1.msra.mxu0 0.0
    %77 = vmatprep.subr.mxu0 0.0
    %78 = vmatpush1.msra.mxu0 0.0
    %79 = vmatprep.subr.mxu0 0.0
    %80 = vmatpush1.msra.mxu0 0.0
    %81 = vmatprep.subr.mxu0 0.0
    %82 = vmatpush1.msra.mxu0 0.0
    %83 = vmatprep.subr.mxu0 0.0
    %84 = vmatpush1.msra.mxu0 0.0
    %85 = vmatprep.subr.mxu0 0.0
    %86 = vmatpush1.msra.mxu0 0.0
    %87 = vmatprep.subr.mxu0 0.0
    %88 = vmatpush1.msra.mxu0 0.0
    %89 = vmatprep.subr.mxu0 0.0
    %90 = vmatpush1.msra.mxu0 0.0
    %91 = vmatprep.subr.mxu0 0.0
    %92 = vmatpush1.msra.mxu0 0.0
    %93 = vmatprep.subr.mxu0 0.0
    %94 = vmatpush1.msra.mxu0 0.0
    %95 = vmatprep.subr.mxu0 0.0
    %96 = vmatpush1.msra.mxu0 0.0
    %97 = vmatprep.subr.mxu0 0.0
    %98 = vmatpush1.msra.mxu0 0.0
    %99 = vmatprep.subr.mxu0 0.0
    %100 = vmatpush1.msra.mxu0 0.0
    %101 = vmatprep.subr.mxu0 0.0
    %102 = vmatpush1.msra.mxu0 0.0
    %103 = vmatprep.subr.mxu0 0.0
    %104 = vmatpush1.msra.mxu0 0.0
    %105 = vmatprep.subr.mxu0 0.0
    %106 = vmatpush1.msra.mxu0 0.0
    %107 = vmatprep.subr.mxu0 0.0
    %108 = vmatpush1.msra.mxu0 0.0
    %109 = vmatprep.mubr.f32.mxu0 0.0
    %110 = vmatmul.mubr.f32.gmra.mrb[0].mxu0 %v40
    %v111 = vpop.f32.mrb[0].mxu0
    %v112 = vadd.f32 0.0, %v111
    %v113 = vpop.f32.mrb[0].mxu0
    %114 = vmatprep.mubr.f32.mxu0 0.0
    %115 = vmatmul.mubr.f32.gmra.mrb[0].mxu0 %v43
    %v116 = vpop.f32.mrb[0].mxu0
    %v117 = vadd.f32 0.0, %v116
    %v118 = vpop.f32.mrb[0].mxu0
    %119 = vdwg.mxu0
    %120 = vmatprep.subr.mxu0 0.0
    %121 = vmatpush1.msra.mxu0 %v112
    %122 = vmatprep.subr.mxu0 0.0
    %123 = vmatpush1.msra.mxu0 %v117
    %124 = vmatprep.subr.mxu0 0.0
    %125 = vmatpush1.msra.mxu0 0.0
    %126 = vmatprep.subr.mxu0 0.0
    %127 = vmatpush1.msra.mxu0 0.0
    %128 = vmatprep.subr.mxu0 0.0
    %129 = vmatpush1.msra.mxu0 0.0
    %130 = vmatprep.subr.mxu0 0.0
    %131 = vmatpush1.msra.mxu0 0.0
    %132 = vmatprep.subr.mxu0 0.0
    %133 = vmatpush1.msra.mxu0 0.0
    %134 = vmatprep.subr.mxu0 0.0
    %135 = vmatpush1.msra.mxu0 0.0
    %136 = vmatprep.subr.mxu0 0.0
    %137 = vmatpush1.msra.mxu0 0.0
    %138 = vmatprep.subr.mxu0 0.0
    %139 = vmatpush1.msra.mxu0 0.0
    %140 = vmatprep.subr.mxu0 0.0
    %141 = vmatpush1.msra.mxu0 0.0
    %142 = vmatprep.subr.mxu0 0.0
    %143 = vmatpush1.msra.mxu0 0.0
    %144 = vmatprep.subr.mxu0 0.0
    %145 = vmatpush1.msra.mxu0 0.0
    %146 = vmatprep.subr.mxu0 0.0
    %147 = vmatpush1.msra.mxu0 0.0
    %148 = vmatprep.subr.mxu0 0.0
    %149 = vmatpush1.msra.mxu0 0.0
    %150 = vmatprep.subr.mxu0 0.0
    %151 = vmatpush1.msra.mxu0 0.0
    %152 = vmatprep.subr.mxu0 0.0
    %153 = vmatpush1.msra.mxu0 0.0
    %154 = vmatprep.subr.mxu0 0.0
    %155 = vmatpush1.msra.mxu0 0.0
    %156 = vmatprep.subr.mxu0 0.0
    %157 = vmatpush1.msra.mxu0 0.0
    %158 = vmatprep.subr.mxu0 0.0
    %159 = vmatpush1.msra.mxu0 0.0
    %160 = vmatprep.subr.mxu0 0.0
    %161 = vmatpush1.msra.mxu0 0.0
    %162 = vmatprep.subr.mxu0 0.0
    %163 = vmatpush1.msra.mxu0 0.0
    %164 = vmatprep.subr.mxu0 0.0
    %165 = vmatpush1.msra.mxu0 0.0
    %166 = vmatprep.subr.mxu0 0.0
    %167 = vmatpush1.msra.mxu0 0.0
    %168 = vmatprep.subr.mxu0 0.0
    %169 = vmatpush1.msra.mxu0 0.0
    %170 = vmatprep.subr.mxu0 0.0
    %171 = vmatpush1.msra.mxu0 0.0
    %172 = vmatprep.subr.mxu0 0.0
    %173 = vmatpush1.msra.mxu0 0.0
    %174 = vmatprep.subr.mxu0 0.0
    %175 = vmatpush1.msra.mxu0 0.0
    %176 = vmatprep.subr.mxu0 0.0
    %177 = vmatpush1.msra.mxu0 0.0
    %178 = vmatprep.subr.mxu0 0.0
    %179 = vmatpush1.msra.mxu0 0.0
    %180 = vmatprep.subr.mxu0 0.0
    %181 = vmatpush1.msra.mxu0 0.0
    %182 = vmatprep.subr.mxu0 0.0
    %183 = vmatpush1.msra.mxu0 0.0
    %184 = vmatprep.mubr.f32.mxu0 0.0
    %185 = vmatmul.mubr.f32.gmra.mrb[0].mxu0 %v40
    %v186 = vpop.f32.mrb[0].mxu0
    %v187 = vadd.f32 0.0, %v186
    %v188 = vpop.f32.mrb[0].mxu0
    %189 = vmatprep.mubr.f32.mxu0 0.0
    %190 = vmatmul.mubr.f32.gmra.mrb[0].mxu0 %v43
    %v191 = vpop.f32.mrb[0].mxu0
    %v192 = vadd.f32 0.0, %v191
    %v193 = vpop.f32.mrb[0].mxu0
    %194 = vdwg.mxu0
    %v195 = vmul.f32 %v187, 2.0
    %v196 = vmul.f32 %v192, 2.0
    %v197 = vsub.f32 %v195, %v34
    %v198 = vsub.f32 %v196, %v35
    %201 = vrot.lane.b32.xlu0 %v112, 4
    %v202 = vpop.permute.xlu0 %201
    %203 = vrot.lane.b32.xlu0 %v117, 4
    %v204 = vpop.permute.xlu0 %203
    %209 = vrot.lane.b32.xlu0 %v197, 8
    %v210 = vpop.permute.xlu0 %209
    %211 = vrot.lane.b32.xlu0 %v198, 8
    %v212 = vpop.permute.xlu0 %211
    %vm215 = vcmask 31744
    %v216 = vsel %vm215, %v34, %v202
    %v217 = vsel %vm215, %v35, %v204
    %vm218 = vcmask 64512
    %v219 = vsel %vm218, %v216, %v210
    %v220 = vsel %vm218, %v217, %v212
    %vm221 = vcmask 97280
    %v223 = vsel %vm221, %v219, 0
    %v226 = vsel %vm221, %v220, 0
    %vm228 = vcmask 1043456
    %v230 = vsel %vm228, %v37, 0
    %232 = vmatprep.subr.mxu0 0.0
    %233 = vmatpush1.msra.mxu0 %v36
    %234 = vmatprep.subr.mxu0 0.0
    %235 = vmatpush1.msra.mxu0 %v230
    %236 = vmatprep.subr.mxu0 0.0
    %237 = vmatpush1.msra.mxu0 0.0
    %238 = vmatprep.subr.mxu0 0.0
    %239 = vmatpush1.msra.mxu0 0.0
    %240 = vmatprep.subr.mxu0 0.0
    %241 = vmatpush1.msra.mxu0 0.0
    %242 = vmatprep.subr.mxu0 0.0
    %243 = vmatpush1.msra.mxu0 0.0
    %244 = vmatprep.subr.mxu0 0.0
    %245 = vmatpush1.msra.mxu0 0.0
    %246 = vmatprep.subr.mxu0 0.0
    %247 = vmatpush1.msra.mxu0 0.0
    %248 = vmatprep.subr.mxu0 0.0
    %249 = vmatpush1.msra.mxu0 0.0
    %250 = vmatprep.subr.mxu0 0.0
    %251 = vmatpush1.msra.mxu0 0.0
    %252 = vmatprep.subr.mxu0 0.0
    %253 = vmatpush1.msra.mxu0 0.0
    %254 = vmatprep.subr.mxu0 0.0
    %255 = vmatpush1.msra.mxu0 0.0
    %256 = vmatprep.subr.mxu0 0.0
    %257 = vmatpush1.msra.mxu0 0.0
    %258 = vmatprep.subr.mxu0 0.0
    %259 = vmatpush1.msra.mxu0 0.0
    %260 = vmatprep.subr.mxu0 0.0
    %261 = vmatpush1.msra.mxu0 0.0
    %262 = vmatprep.subr.mxu0 0.0
    %263 = vmatpush1.msra.mxu0 0.0
    %264 = vmatprep.subr.mxu0 0.0
    %265 = vmatpush1.msra.mxu0 0.0
    %266 = vmatprep.subr.mxu0 0.0
    %267 = vmatpush1.msra.mxu0 0.0
    %268 = vmatprep.subr.mxu0 0.0
    %269 = vmatpush1.msra.mxu0 0.0
    %270 = vmatprep.subr.mxu0 0.0
    %271 = vmatpush1.msra.mxu0 0.0
    %272 = vmatprep.subr.mxu0 0.0
    %273 = vmatpush1.msra.mxu0 0.0
    %274 = vmatprep.subr.mxu0 0.0
    %275 = vmatpush1.msra.mxu0 0.0
    %276 = vmatprep.subr.mxu0 0.0
    %277 = vmatpush1.msra.mxu0 0.0
    %278 = vmatprep.subr.mxu0 0.0
    %279 = vmatpush1.msra.mxu0 0.0
    %280 = vmatprep.subr.mxu0 0.0
    %281 = vmatpush1.msra.mxu0 0.0
    %282 = vmatprep.subr.mxu0 0.0
    %283 = vmatpush1.msra.mxu0 0.0
    %284 = vmatprep.subr.mxu0 0.0
    %285 = vmatpush1.msra.mxu0 0.0
    %286 = vmatprep.subr.mxu0 0.0
    %287 = vmatpush1.msra.mxu0 0.0
    %288 = vmatprep.subr.mxu0 0.0
    %289 = vmatpush1.msra.mxu0 0.0
    %290 = vmatprep.subr.mxu0 0.0
    %291 = vmatpush1.msra.mxu0 0.0
    %292 = vmatprep.subr.mxu0 0.0
    %293 = vmatpush1.msra.mxu0 0.0
    %294 = vmatprep.subr.mxu0 0.0
    %295 = vmatpush1.msra.mxu0 0.0
    %296 = vmatprep.mubr.f32.mxu0 0.0
    %297 = vmatmul.mubr.f32.gmra.mrb[0].mxu0 %v223
    %v298 = vpop.f32.mrb[0].mxu0
    %v299 = vadd.f32 0.0, %v298
    %v300 = vpop.f32.mrb[0].mxu0
    %301 = vmatprep.mubr.f32.mxu0 0.0
    %302 = vmatmul.mubr.f32.gmra.mrb[0].mxu0 %v226
    %v303 = vpop.f32.mrb[0].mxu0
    %v304 = vadd.f32 0.0, %v303
    %v305 = vpop.f32.mrb[0].mxu0
    %306 = vdwg.mxu0
    %309 = vrot.lane.b32.xlu0 %v34, 124
    %v310 = vpop.permute.xlu0 %309
    %311 = vrot.lane.b32.xlu0 %v35, 124
    %v312 = vpop.permute.xlu0 %311
    %315 = vrot.lane.b32.xlu0 %v197, 4
    %v316 = vpop.permute.xlu0 %315
    %317 = vrot.lane.b32.xlu0 %v198, 4
    %v318 = vpop.permute.xlu0 %317
    %v321 = vsel %vm215, %v310, %v112
    %v322 = vsel %vm215, %v312, %v117
    %v323 = vsel %vm218, %v321, %v316
    %v324 = vsel %vm218, %v322, %v318
    %v326 = vsel %vm221, %v323, 0
    %v329 = vsel %vm221, %v324, 0
    %331 = vmatprep.subr.mxu0 0.0
    %332 = vmatpush1.msra.mxu0 %v36
    %333 = vmatprep.subr.mxu0 0.0
    %334 = vmatpush1.msra.mxu0 %v230
    %335 = vmatprep.subr.mxu0 0.0
    %336 = vmatpush1.msra.mxu0 0.0
    %337 = vmatprep.subr.mxu0 0.0
    %338 = vmatpush1.msra.mxu0 0.0
    %339 = vmatprep.subr.mxu0 0.0
    %340 = vmatpush1.msra.mxu0 0.0
    %341 = vmatprep.subr.mxu0 0.0
    %342 = vmatpush1.msra.mxu0 0.0
    %343 = vmatprep.subr.mxu0 0.0
    %344 = vmatpush1.msra.mxu0 0.0
    %345 = vmatprep.subr.mxu0 0.0
    %346 = vmatpush1.msra.mxu0 0.0
    %347 = vmatprep.subr.mxu0 0.0
    %348 = vmatpush1.msra.mxu0 0.0
    %349 = vmatprep.subr.mxu0 0.0
    %350 = vmatpush1.msra.mxu0 0.0
    %351 = vmatprep.subr.mxu0 0.0
    %352 = vmatpush1.msra.mxu0 0.0
    %353 = vmatprep.subr.mxu0 0.0
    %354 = vmatpush1.msra.mxu0 0.0
    %355 = vmatprep.subr.mxu0 0.0
    %356 = vmatpush1.msra.mxu0 0.0
    %357 = vmatprep.subr.mxu0 0.0
    %358 = vmatpush1.msra.mxu0 0.0
    %359 = vmatprep.subr.mxu0 0.0
    %360 = vmatpush1.msra.mxu0 0.0
    %361 = vmatprep.subr.mxu0 0.0
    %362 = vmatpush1.msra.mxu0 0.0
    %363 = vmatprep.subr.mxu0 0.0
    %364 = vmatpush1.msra.mxu0 0.0
    %365 = vmatprep.subr.mxu0 0.0
    %366 = vmatpush1.msra.mxu0 0.0
    %367 = vmatprep.subr.mxu0 0.0
    %368 = vmatpush1.msra.mxu0 0.0
    %369 = vmatprep.subr.mxu0 0.0
    %370 = vmatpush1.msra.mxu0 0.0
    %371 = vmatprep.subr.mxu0 0.0
    %372 = vmatpush1.msra.mxu0 0.0
    %373 = vmatprep.subr.mxu0 0.0
    %374 = vmatpush1.msra.mxu0 0.0
    %375 = vmatprep.subr.mxu0 0.0
    %376 = vmatpush1.msra.mxu0 0.0
    %377 = vmatprep.subr.mxu0 0.0
    %378 = vmatpush1.msra.mxu0 0.0
    %379 = vmatprep.subr.mxu0 0.0
    %380 = vmatpush1.msra.mxu0 0.0
    %381 = vmatprep.subr.mxu0 0.0
    %382 = vmatpush1.msra.mxu0 0.0
    %383 = vmatprep.subr.mxu0 0.0
    %384 = vmatpush1.msra.mxu0 0.0
    %385 = vmatprep.subr.mxu0 0.0
    %386 = vmatpush1.msra.mxu0 0.0
    %387 = vmatprep.subr.mxu0 0.0
    %388 = vmatpush1.msra.mxu0 0.0
    %389 = vmatprep.subr.mxu0 0.0
    %390 = vmatpush1.msra.mxu0 0.0
    %391 = vmatprep.subr.mxu0 0.0
    %392 = vmatpush1.msra.mxu0 0.0
    %393 = vmatprep.subr.mxu0 0.0
    %394 = vmatpush1.msra.mxu0 0.0
    %395 = vmatprep.mubr.f32.mxu0 0.0
    %396 = vmatmul.mubr.f32.gmra.mrb[0].mxu0 %v326
    %v397 = vpop.f32.mrb[0].mxu0
    %v398 = vadd.f32 0.0, %v397
    %v399 = vpop.f32.mrb[0].mxu0
    %400 = vmatprep.mubr.f32.mxu0 0.0
    %401 = vmatmul.mubr.f32.gmra.mrb[0].mxu0 %v329
    %v402 = vpop.f32.mrb[0].mxu0
    %v403 = vadd.f32 0.0, %v402
    %v404 = vpop.f32.mrb[0].mxu0
    %405 = vdwg.mxu0
    %408 = vrot.lane.b32.xlu0 %v398, 32
    %v409 = vpop.permute.xlu0 %408
    %410 = vrot.lane.b32.xlu0 %v403, 32
    %v411 = vpop.permute.xlu0 %410
    %vm414 = vcmask 261120
    %v415 = vsel %vm414, %v299, %v409
    %v416 = vsel %vm414, %v304, %v411
    %v417 = vld [vmem:[%s3] sm:$0x1]
    %v419 = vlaneseq
    %v420 = vshrl.u32 %v419, 7
    %v421 = vsub.s32 0, %v420
    %v422 = vrot.slane %v417, %v421
    %v424 = vadd.f32 %v415, %v422
    %v425 = vadd.f32 %v416, %v422
    %vm426 = vcmask 523264
    %427 = vst.msk [vmem:[#allocation5] sm:$0xff] %vm426, %v424
    %428 = vst.msk [vmem:[#allocation5 + $0x8] sm:$0xff] %vm426, %v425
    // Predicated region
    $region22: #{tpu_custom_call.1} parent=1 // pred_check
      _
    $region23: #{tpu_custom_call.1} parent=1 // pred_check_branch
      %430 = sbr.rel (0) target = $region25
    $region24: #{tpu_custom_call.1} parent=1 // pred_region
      %s432 = ssub.s32 256, 256
      %433 = vsyncadd [#allocation4], %s432
      %s434 = sshll.u32 [#allocation5], 4
      %s435 = int_to_ptr.vmem [resolvable:$true] %s434
      %440 = dma.vmem_to_hbm [thread:$0]  %s435, 256, %s4, [#allocation4], 128, 128, 8
    $region25: #{tpu_custom_call.1} parent=1 // pred_fallthru
      _
    // Predicated region
    $region26: #{tpu_custom_call.1} parent=1 // pred_check
      _
    $region27: #{tpu_custom_call.1} parent=1 // pred_check_branch
      %442 = sbr.rel (0) target = $region29
    $region28: #{tpu_custom_call.1} parent=1 // pred_region
      %443 = dma.done [#allocation4], 256
    $region29: #{tpu_custom_call.1} parent=1 // pred_fallthru
      _
    %444 = vsyncpa [#allocation3], 1
    %445 = vsyncpa [#allocation4], 1

</llo_original>
